<compile_context>
chip_gen: v6e
topology: v6e:2x2x1
jax: 0.10.0
libtpu: 0.0.40
codegen_flags: <defaults>
</compile_context>

<pallas_src>
import functools
import math

import jax
import jax.numpy as jnp
from jax.experimental import pallas as pl
from jax.experimental.pallas import tpu as pltpu


_VMEM_LIMIT = 32 * 1024 * 1024          # explicit, portable across v5e/v6e/v7x
_TARGET_BLOCK_BYTES = 4 * 1024 * 1024   # per-step working-set target (per stream set)


def _round_up(x, m):
    return ((x + m - 1) // m) * m


def _pick_tile(p, max_tile):
    """Pick a pixel tile.  Returns (tile, padded_len) with padded_len % tile == 0.

    If the pixel axis has to be split, the tile is a multiple of 1024 so the
    (tile//128, 128) block keeps fully dense (8, 128) sublane tiles.  If it
    fits in one block, the block simply equals the (128-padded) array.
    """
    max_tile = max(1024, (max_tile // 1024) * 1024)
    p128 = _round_up(p, 128)
    if p128 <= max_tile:
        return p128, p128
    return max_tile, _round_up(p, max_tile)


def _geometric_sum(d, n):
    """sum_{i=0}^{n-1} d**i, in Python double precision (guards d == 1)."""
    d = float(d)
    if d == 1.0:
        return float(n)
    try:
        dn = d ** n
    except OverflowError:
        dn = float("inf")
    return (1.0 - dn) / (1.0 - d)


def _effective_k(d, p):
    """Smallest k with d**k == 0 in float32 (denormal bound, with margin).

    Sorted values past that index get weight exactly zero, so truncating the
    descending sort to its top-k is exact w.r.t. the float32 reference.
    """
    d = float(d)
    if not 0.0 < d < 1.0:
        return p
    k = int(math.ceil(149.0 * math.log(2.0) / -math.log(d))) + 1
    return min(p, k)


# ----------------------------------------------------------------------------
# Kernel 1: softmax over the class dim, emit fg (ch 1) / bg (ch 0) planes.
# Block layout: (N, C, S, 128) — pixels dense on (sublane, lane), classes as a
# leading axis so the class reduction is elementwise across loaded vregs.
# ----------------------------------------------------------------------------
def _softmax_fg_bg_kernel(logits_ref, bg_ref, fg_ref):
    x = logits_ref[...].astype(jnp.float32)            # (N, C, S, 128)
    m = jnp.max(x, axis=1, keepdims=True)               # (N, 1, S, 128)
    e = jnp.exp(x - m)
    inv_denom = 1.0 / jnp.sum(e, axis=1)                 # (N, S, 128): one divide
    bg_ref[...] = e[:, 0] * inv_denom
    fg_ref[...] = e[:, 1] * inv_denom


def softmax_fg_bg(logits_ncp, *, max_tile=None):
    """logits_ncp: (N, C, P) any float dtype -> (bg, fg), each (N, P) float32."""
    N, C, P = logits_ncp.shape
    itemsize = jnp.dtype(logits_ncp.dtype).itemsize
    if max_tile is None:
        bytes_per_px = N * C * itemsize + 2 * N * 4      # input block + both outputs
        max_tile = min(65536, max(1024, _TARGET_BLOCK_BYTES // bytes_per_px))
    tp, p_pad = _pick_tile(P, max_tile)
    if p_pad != P:
        logits_ncp = jnp.pad(logits_ncp, ((0, 0), (0, 0), (0, p_pad - P)))
    logits4 = logits_ncp.reshape(N, C, p_pad // 128, 128)
    s = tp // 128

    bg4, fg4 = pl.pallas_call(
        _softmax_fg_bg_kernel,
        out_shape=(jax.ShapeDtypeStruct((N, p_pad // 128, 128), jnp.float32),
                   jax.ShapeDtypeStruct((N, p_pad // 128, 128), jnp.float32)),
        grid_spec=pltpu.PrefetchScalarGridSpec(
            num_scalar_prefetch=0,
            grid=(p_pad // tp,),
            in_specs=[pl.BlockSpec((N, C, s, 128), lambda i: (0, 0, i, 0))],
            out_specs=[pl.BlockSpec((N, s, 128), lambda i: (0, i, 0)),
                       pl.BlockSpec((N, s, 128), lambda i: (0, i, 0))],
        ),
        compiler_params=pltpu.CompilerParams(
            dimension_semantics=("parallel",),
            vmem_limit_bytes=_VMEM_LIMIT),
    )(logits4)

    # Padded pixels hold 1/C probabilities; slice them off BEFORE any sort /
    # top-k so they cannot rank near the top and corrupt the loss.
    bg = bg4.reshape(N, p_pad)[:, :P]
    fg = fg4.reshape(N, p_pad)[:, :P]
    return bg, fg


# ----------------------------------------------------------------------------
# Kernel 2: streaming geometric-weighted reduction over the sorted pixel axis.
#   g_fg[n] = sum_j fg_sorted[n,j] * d_fg^j / sum_{j<P} d_fg^j   (same for bg)
#   loss    = -mean_n log(g_fg) - mean_n log(g_bg)
# Weights never touch HBM per step: a resident (S,128) base tile d^(s*128+l)
# is scaled by the per-step scalar d^(i*tile) read from SMEM (scalar prefetch).
# Accumulation is purely elementwise; one cross-lane reduce in the finalize.
# ----------------------------------------------------------------------------
def _expand_reduce_kernel(scales_ref, fg_ref, bg_ref, fwb_ref, bwb_ref,
                          out_ref, facc, bacc, *,
                          num_steps, inv_sum_fw, inv_sum_bw):
    i = pl.program_id(0)

    @pl.when(i == 0)
    def _():
        facc[...] = jnp.zeros_like(facc)
        bacc[...] = jnp.zeros_like(bacc)

    fg = fg_ref[...].astype(jnp.float32)                 # (N, S, 128)
    bg = bg_ref[...].astype(jnp.float32)
    # Resident base weight tiles (block index constant -> fetched once),
    # scaled by d^(i*tile) from SMEM.
    fw = fwb_ref[...] * scales_ref[i]                     # (S, 128)
    bw = bwb_ref[...] * scales_ref[num_steps + i]
    # Elementwise-only accumulation (no per-step XLU reduce).
    facc[...] += fg * fw
    bacc[...] += bg * bw

    @pl.when(i == pl.num_programs(0) - 1)
    def _():
        sf = jnp.sum(jnp.sum(facc[...], axis=2), axis=1, keepdims=True)   # (N, 1)
        sb = jnp.sum(jnp.sum(bacc[...], axis=2), axis=1, keepdims=True)
        g_fg = sf * inv_sum_fw
        g_bg = sb * inv_sum_bw
        loss_fg = -jnp.mean(jnp.log(g_fg), axis=0, keepdims=True)          # (1, 1)
        loss_bg = -jnp.mean(jnp.log(g_bg), axis=0, keepdims=True)
        out_ref[...] = loss_fg + loss_bg


def expand_weighted_reduce(fg_sorted, bg_sorted, *, d_fg, d_bg, weight_len,
                           max_tile=None):
    """fg/bg_sorted: (N, K) sorted descending; weight_len = P (denominator range)."""
    N, K = fg_sorted.shape
    if max_tile is None:
        bytes_per_px = 4 * N * 4            # fg+bg streamed + facc+bacc resident
        max_tile = min(65536, max(1024, _TARGET_BLOCK_BYTES // bytes_per_px))
    tp, k_pad = _pick_tile(K, max_tile)
    pad = k_pad - K
    if pad:
        # Sorted values padded with 0 contribute nothing regardless of weight.
        fg_sorted = jnp.pad(fg_sorted, ((0, 0), (0, pad)))
        bg_sorted = jnp.pad(bg_sorted, ((0, 0), (0, pad)))
    fg_r = fg_sorted.reshape(N, k_pad // 128, 128)
    bg_r = bg_sorted.reshape(N, k_pad // 128, 128)
    s = tp // 128
    num_steps = k_pad // tp

    # Geometric weights, generated once on the host/XLA side:
    #   base tile d^(s*128 + l) — stays VMEM-resident (one block, constant index)
    #   per-step scales d^(i*tile) — tiny SMEM scalar-prefetch array.
    j = jnp.arange(tp, dtype=jnp.float32)
    fw_base = jnp.power(jnp.float32(d_fg), j).reshape(s, 128)
    bw_base = jnp.power(jnp.float32(d_bg), j).reshape(s, 128)
    steps = jnp.arange(num_steps, dtype=jnp.float32) * float(tp)
    scales = jnp.concatenate([jnp.power(jnp.float32(d_fg), steps),
                              jnp.power(jnp.float32(d_bg), steps)])   # (2*num_steps,)

    kernel = functools.partial(
        _expand_reduce_kernel,
        num_steps=num_steps,
        inv_sum_fw=1.0 / _geometric_sum(d_fg, weight_len),
        inv_sum_bw=1.0 / _geometric_sum(d_bg, weight_len))

    out = pl.pallas_call(
        kernel,
        out_shape=jax.ShapeDtypeStruct((1, 1), jnp.float32),
        grid_spec=pltpu.PrefetchScalarGridSpec(
            num_scalar_prefetch=1,
            grid=(num_steps,),
            in_specs=[pl.BlockSpec((N, s, 128), lambda i, sc: (0, i, 0)),
                      pl.BlockSpec((N, s, 128), lambda i, sc: (0, i, 0)),
                      pl.BlockSpec((s, 128), lambda i, sc: (0, 0)),
                      pl.BlockSpec((s, 128), lambda i, sc: (0, 0))],
            out_specs=pl.BlockSpec((1, 1), lambda i, sc: (0, 0)),
            scratch_shapes=[pltpu.VMEM((N, s, 128), jnp.float32),
                            pltpu.VMEM((N, s, 128), jnp.float32)],
        ),
        compiler_params=pltpu.CompilerParams(
            dimension_semantics=("arbitrary",),
            vmem_limit_bytes=_VMEM_LIMIT),
    )(scales, fg_r, bg_r, fw_base, bw_base)
    return out[0, 0]


# ----------------------------------------------------------------------------
# ExpandLoss (forward only) — matches the PyTorch reference semantics.
# ----------------------------------------------------------------------------
class ExpandLoss:
    def __init__(self, d_fg, d_bg):
        self.d_fg = float(d_fg)
        self.d_bg = float(d_bg)

    def __call__(self, predicts):
        N, C, H, W = predicts.shape
        P = H * W
        # Lane-dense layout: no NCHW->NHWC transpose; pixels go onto the
        # (sublane, lane) plane, classes stay a small leading axis.
        logits = predicts.reshape(N, C, P)

        bg, fg = softmax_fg_bg(logits)                  # each (N, P) float32

        # TODO(synk): the per-row descending sort has no clean Pallas TPU
        # equivalent (cross-lane compare/permute network); use XLA top_k,
        # truncated to the largest k whose float32 weight d^k is still
        # nonzero — exact w.r.t. the full-sort reference and far cheaper at
        # large P.
        k = max(_effective_k(self.d_fg, P), _effective_k(self.d_bg, P))
        fg_top, _ = jax.lax.top_k(fg, k)
        bg_top, _ = jax.lax.top_k(bg, k)

        return expand_weighted_reduce(
            fg_top, bg_top, d_fg=self.d_fg, d_bg=self.d_bg, weight_len=P)


# ----------------------------------------------------------------------------
# Pure-JAX reference (for the correctness check in the demo).
# ----------------------------------------------------------------------------
def _reference_expand_loss(predicts, d_fg, d_bg):
    N, C, H, W = predicts.shape
    p = jax.nn.softmax(predicts.astype(jnp.float32), axis=1)
    fg = p[:, 1].reshape(N, -1)
    bg = p[:, 0].reshape(N, -1)
    P = fg.shape[1]
    fg_s = -jnp.sort(-fg, axis=1)
    bg_s = -jnp.sort(-bg, axis=1)
    idx = jnp.arange(P, dtype=jnp.float32)
    fw = jnp.power(jnp.float32(d_fg), idx)
    bw = jnp.power(jnp.float32(d_bg), idx)
    g_fg = jnp.sum(fg_s * fw, axis=1) / jnp.sum(fw)
    g_bg = jnp.sum(bg_s * bw, axis=1) / jnp.sum(bw)
    return -jnp.mean(jnp.log(g_fg)) - jnp.mean(jnp.log(g_bg))


# ----------------------------------------------------------------------------
if __name__ == "__main__":
    key = jax.random.PRNGKey(0)
    N, C, H, W = 2, 4, 16, 16
    predicts = jax.random.normal(key, (N, C, H, W), jnp.float32)

    d_fg, d_bg = 0.9, 0.85
    loss_fn = ExpandLoss(d_fg=d_fg, d_bg=d_bg)

    total = jax.block_until_ready(loss_fn(predicts))
    ref = jax.block_until_ready(_reference_expand_loss(predicts, d_fg, d_bg))

    assert jnp.isfinite(total), total
    assert jnp.allclose(total, ref, rtol=1e-4, atol=1e-5), (total, ref)
    print("KERNEL_OK")
</pallas_src>

<mosaic_0001>
module attributes {stable_mosaic.version = 11 : i64} {
  func.func @_softmax_fg_bg_kernel(%arg0: i32, %arg1: memref<2x4x2x128xf32, #tpu.memory_space<vmem>>, %arg2: memref<2x2x128xf32, #tpu.memory_space<vmem>>, %arg3: memref<2x2x128xf32, #tpu.memory_space<vmem>>) attributes {dimension_semantics = [#tpu.dimension_semantics<parallel>], iteration_bounds = array<i64: 1>, scalar_prefetch = 0 : i64, scratch_operands = 0 : i64, tpu.core_type = #tpu.core_type<tc>, window_params = [{transform_indices = @transform_0, window_bounds = array<i64: 2, 4, 2, 128>}, {transform_indices = @transform_1, window_bounds = array<i64: 2, 2, 128>}, {transform_indices = @transform_2, window_bounds = array<i64: 2, 2, 128>}]} {
    %c0 = arith.constant 0 : index
    %c0_0 = arith.constant 0 : index
    %c0_1 = arith.constant 0 : index
    %c0_2 = arith.constant 0 : index
    %0 = vector.load %arg1[%c0, %c0_0, %c0_1, %c0_2] : memref<2x4x2x128xf32, #tpu.memory_space<vmem>>, vector<2x4x2x128xf32>
    %cst = arith.constant dense<0xFF800000> : vector<2x2x128xf32>
    %1 = vector.multi_reduction <maximumf>, %0, %cst [1] : vector<2x4x2x128xf32> to vector<2x2x128xf32>
    %2 = vector.shape_cast %1 : vector<2x2x128xf32> to vector<2x1x2x128xf32>
    %3 = vector.broadcast %2 : vector<2x1x2x128xf32> to vector<2x4x2x128xf32>
    %4 = arith.subf %0, %3 : vector<2x4x2x128xf32>
    %5 = math.exp %4 : vector<2x4x2x128xf32>
    %cst_3 = arith.constant dense<0.000000e+00> : vector<2x2x128xf32>
    %6 = vector.multi_reduction <add>, %5, %cst_3 [1] : vector<2x4x2x128xf32> to vector<2x2x128xf32>
    %cst_4 = arith.constant 1.000000e+00 : f32
    %7 = vector.broadcast %cst_4 : f32 to vector<2x2x128xf32>
    %8 = arith.divf %7, %6 : vector<2x2x128xf32>
    %9 = vector.extract_strided_slice %5 {offsets = [0, 0, 0, 0], sizes = [2, 1, 2, 128], strides = [1, 1, 1, 1]} : vector<2x4x2x128xf32> to vector<2x1x2x128xf32>
    %10 = vector.shape_cast %9 : vector<2x1x2x128xf32> to vector<2x2x128xf32>
    %11 = arith.mulf %10, %8 : vector<2x2x128xf32>
    %c0_5 = arith.constant 0 : index
    %c0_6 = arith.constant 0 : index
    %c0_7 = arith.constant 0 : index
    %12 = vector.load %arg2[%c0_5, %c0_6, %c0_7] : memref<2x2x128xf32, #tpu.memory_space<vmem>>, vector<2x2x128xf32>
    tpu.vector_store %arg2[%c0_5, %c0_6, %c0_7], %11 {strides = array<i32>} : memref<2x2x128xf32, #tpu.memory_space<vmem>>, vector<2x2x128xf32>,
    %13 = vector.extract_strided_slice %5 {offsets = [0, 1, 0, 0], sizes = [2, 1, 2, 128], strides = [1, 1, 1, 1]} : vector<2x4x2x128xf32> to vector<2x1x2x128xf32>
    %14 = vector.shape_cast %13 : vector<2x1x2x128xf32> to vector<2x2x128xf32>
    %15 = arith.mulf %14, %8 : vector<2x2x128xf32>
    %c0_8 = arith.constant 0 : index
    %c0_9 = arith.constant 0 : index
    %c0_10 = arith.constant 0 : index
    %16 = vector.load %arg3[%c0_8, %c0_9, %c0_10] : memref<2x2x128xf32, #tpu.memory_space<vmem>>, vector<2x2x128xf32>
    tpu.vector_store %arg3[%c0_8, %c0_9, %c0_10], %15 {strides = array<i32>} : memref<2x2x128xf32, #tpu.memory_space<vmem>>, vector<2x2x128xf32>,
    return
  }
  func.func @transform_0(%arg0: i32) -> (i32, i32, i32, i32) {
    %c0_i32 = arith.constant 0 : i32
    %c0_i32_0 = arith.constant 0 : i32
    %c0_i32_1 = arith.constant 0 : i32
    %c0_i32_2 = arith.constant 0 : i32
    return %c0_i32, %c0_i32_0, %arg0, %c0_i32_1 : i32, i32, i32, i32
  }
  func.func @transform_1(%arg0: i32) -> (i32, i32, i32) {
    %c0_i32 = arith.constant 0 : i32
    %c0_i32_0 = arith.constant 0 : i32
    %c0_i32_1 = arith.constant 0 : i32
    return %c0_i32, %arg0, %c0_i32_0 : i32, i32, i32
  }
  func.func @transform_2(%arg0: i32) -> (i32, i32, i32) {
    %c0_i32 = arith.constant 0 : i32
    %c0_i32_0 = arith.constant 0 : i32
    %c0_i32_1 = arith.constant 0 : i32
    return %c0_i32, %arg0, %c0_i32_0 : i32, i32, i32
  }
}

</mosaic_0001>

<llo_original>
// kernel: tpu_custom_call.1
$region0: #{tpu_custom_call.1}
  #allocation0 [shape = 'u32[]', space=smem, size = 0x4, offset = 0x4, fixed_abs, tag = 'smem constant byte address 0x4 - core index']
  #allocation1 [shape = 'u32[144,128]{1,0:T(1,128)}', space=vmem, size = 0x12000, scoped, tag = 'internal scratch']
  %s0 = inlined_call_operand.hbm [shape: f32[2,4,2,128], index: 0, kind: input, shape index: {}]
  %s1 = inlined_call_operand.hbm [shape: f32[2,2,128], index: 1, kind: output, shape index: {0}]
  %s2 = inlined_call_operand.hbm [shape: f32[2,2,128], index: 2, kind: output, shape index: {1}]
  %3 = xla_tuple %s1, %s2
  %s4 = sld [smem:[#allocation0]]
  $region26: #{tpu_custom_call.1} parent=0
    _
  %s6 = ssub.s32 1, %s4
  %s7 = scalar_select 0, %s6, %s4
  $region1: #{tpu_custom_call.1} parent=0
    #allocation2 [shape = 'u8[8192]{0}', space=vmem, size = 0x2000, scoped, tag = 'input window, operand 0, single buffered']
    #allocation3 [shape = 's32[1]{0}', space=sflag, size = 0x4, scoped, tag = 'scoped memory for tpu_custom_call.1']
    #allocation4 [shape = 's32[1]{0}', space=sflag, size = 0x4, scoped, tag = 'scoped memory for tpu_custom_call.1']
    #allocation5 [shape = 'u8[2048]{0}', space=vmem, size = 0x800, scoped, tag = 'output window, operand 0, single buffered']
    #allocation6 [shape = 'u8[2048]{0}', space=vmem, size = 0x800, scoped, tag = 'output window, operand 1, single buffered']
    #allocation7 [shape = 's32[1]{0}', space=sflag, size = 0x4, scoped, tag = 'scoped memory for tpu_custom_call.1']
    %8 = vsyncpa [#allocation3], 0
    %9 = vsyncpa [#allocation4], 0
    %10 = vsyncpa [#allocation7], 0
    // Predicated region
    $region2: #{tpu_custom_call.1} parent=1 // pred_check
      _
    $region3: #{tpu_custom_call.1} parent=1 // pred_check_branch
      %12 = sbr.rel (0) target = $region5
    $region4: #{tpu_custom_call.1} parent=1 // pred_region
      %s14 = ssub.s32 256, 256
      %15 = vsyncadd [#allocation3], %s14
      %s16 = sshll.u32 [#allocation2], 4
      %s17 = int_to_ptr.vmem [resolvable:$true] %s16
      %22 = dma.hbm_to_vmem [thread:$0]  %s0, 256, %s17, [#allocation3], 32, 32, 2
    $region5: #{tpu_custom_call.1} parent=1 // pred_fallthru
      _
    // Predicated region
    $region6: #{tpu_custom_call.1} parent=1 // pred_check
      _
    $region7: #{tpu_custom_call.1} parent=1 // pred_check_branch
      %24 = sbr.rel (0) target = $region9
    $region8: #{tpu_custom_call.1} parent=1 // pred_region
      %25 = dma.done [#allocation3], 256
    $region9: #{tpu_custom_call.1} parent=1 // pred_fallthru
      _
    %v26 = vld [vmem:[#allocation2] sm:$0x3]
    %v27 = vld [vmem:[#allocation2 + $0x2] sm:$0x3]
    %v28 = vld [vmem:[#allocation2 + $0x4] sm:$0x3]
    %v29 = vld [vmem:[#allocation2 + $0x6] sm:$0x3]
    %v30 = vld [vmem:[#allocation2 + $0x8] sm:$0x3]
    %v31 = vld [vmem:[#allocation2 + $0xa] sm:$0x3]
    %v32 = vld [vmem:[#allocation2 + $0xc] sm:$0x3]
    %v33 = vld [vmem:[#allocation2 + $0xe] sm:$0x3]
    %vm34 = vcmask 1041408
    %v35 = vsel %vm34, %v26, -inf
    %v36 = vsel %vm34, %v27, -inf
    %v37 = vsel %vm34, %v28, -inf
    %v38 = vmax.f32 %v35, %v37
    %v39 = vsel %vm34, %v29, -inf
    %v40 = vmax.f32 %v36, %v39
    %v41 = vmax.f32 %v38, %v40
    %v42 = vsel %vm34, %v30, -inf
    %v43 = vsel %vm34, %v31, -inf
    %v44 = vsel %vm34, %v32, -inf
    %v45 = vmax.f32 %v42, %v44
    %v46 = vsel %vm34, %v33, -inf
    %v47 = vmax.f32 %v43, %v46
    %v48 = vmax.f32 %v45, %v47
    %v49 = vsub.f32 %v26, %v41
    %v50 = vsub.f32 %v27, %v41
    %v51 = vsub.f32 %v28, %v41
    %v52 = vsub.f32 %v29, %v41
    %v53 = vsub.f32 %v30, %v48
    %v54 = vsub.f32 %v31, %v48
    %v55 = vsub.f32 %v32, %v48
    %v56 = vsub.f32 %v33, %v48
    %v57 = vmul.f32 %v49, 1.442695
    %v58 = vpow.pop %v57
    %v59 = vmul.f32 %v50, 1.442695
    %v60 = vpow.pop %v59
    %v61 = vmul.f32 %v51, 1.442695
    %v62 = vpow.pop %v61
    %v63 = vmul.f32 %v52, 1.442695
    %v64 = vpow.pop %v63
    %v65 = vmul.f32 %v53, 1.442695
    %v66 = vpow.pop %v65
    %v67 = vmul.f32 %v54, 1.442695
    %v68 = vpow.pop %v67
    %v69 = vmul.f32 %v55, 1.442695
    %v70 = vpow.pop %v69
    %v71 = vmul.f32 %v56, 1.442695
    %v72 = vpow.pop %v71
    %v73 = vsel %vm34, %v58, 0.0
    %v74 = vsel %vm34, %v60, 0.0
    %v75 = vadd.f32 %v73, %v74
    %v76 = vsel %vm34, %v62, 0.0
    %v77 = vadd.f32 %v75, %v76
    %v78 = vsel %vm34, %v64, 0.0
    %v79 = vadd.f32 %v77, %v78
    %v80 = vsel %vm34, %v66, 0.0
    %v81 = vsel %vm34, %v68, 0.0
    %v82 = vadd.f32 %v80, %v81
    %v83 = vsel %vm34, %v70, 0.0
    %v84 = vadd.f32 %v82, %v83
    %v85 = vsel %vm34, %v72, 0.0
    %v86 = vadd.f32 %v84, %v85
    %v87 = vrcp.pop %v79
    %v88 = vmul.f32 1.0, %v87
    %v89 = vrcp.pop %v86
    %v90 = vmul.f32 1.0, %v89
    %v91 = vmul.f32 %v58, %v88
    %v92 = vmul.f32 %v66, %v90
    %93 = vst [vmem:[#allocation5] sm:$0x3] %v91
    %94 = vst [vmem:[#allocation5 + $0x2] sm:$0x3] %v92
    %v95 = vmul.f32 %v60, %v88
    %v96 = vmul.f32 %v68, %v90
    %97 = vst [vmem:[#allocation6] sm:$0x3] %v95
    %98 = vst [vmem:[#allocation6 + $0x2] sm:$0x3] %v96
    // Predicated region
    $region10: #{tpu_custom_call.1} parent=1 // pred_check
      _
    $region11: #{tpu_custom_call.1} parent=1 // pred_check_branch
      %100 = sbr.rel (0) target = $region13
    $region12: #{tpu_custom_call.1} parent=1 // pred_region
      %s102 = ssub.s32 64, 64
      %103 = vsyncadd [#allocation4], %s102
      %s104 = sshll.u32 [#allocation5], 4
      %s105 = int_to_ptr.vmem [resolvable:$true] %s104
      %110 = dma.vmem_to_hbm [thread:$0]  %s105, 64, %s1, [#allocation4], 32, 32, 2
    $region13: #{tpu_custom_call.1} parent=1 // pred_fallthru
      _
    // Predicated region
    $region14: #{tpu_custom_call.1} parent=1 // pred_check
      _
    $region15: #{tpu_custom_call.1} parent=1 // pred_check_branch
      %112 = sbr.rel (0) target = $region17
    $region16: #{tpu_custom_call.1} parent=1 // pred_region
      %s114 = ssub.s32 64, 64
      %115 = vsyncadd [#allocation7], %s114
      %s116 = sshll.u32 [#allocation6], 4
      %s117 = int_to_ptr.vmem [resolvable:$true] %s116
      %122 = dma.vmem_to_hbm [thread:$0]  %s117, 64, %s2, [#allocation7], 32, 32, 2
    $region17: #{tpu_custom_call.1} parent=1 // pred_fallthru
      _
    // Predicated region
    $region18: #{tpu_custom_call.1} parent=1 // pred_check
      _
    $region19: #{tpu_custom_call.1} parent=1 // pred_check_branch
      %124 = sbr.rel (0) target = $region21
    $region20: #{tpu_custom_call.1} parent=1 // pred_region
      %125 = dma.done [#allocation4], 64
    $region21: #{tpu_custom_call.1} parent=1 // pred_fallthru
      _
    // Predicated region
    $region22: #{tpu_custom_call.1} parent=1 // pred_check
      _
    $region23: #{tpu_custom_call.1} parent=1 // pred_check_branch
      %127 = sbr.rel (0) target = $region25
    $region24: #{tpu_custom_call.1} parent=1 // pred_region
      %128 = dma.done [#allocation7], 64
    $region25: #{tpu_custom_call.1} parent=1 // pred_fallthru
      _
    %129 = vsyncpa [#allocation3], 1
    %130 = vsyncpa [#allocation4], 1
    %131 = vsyncpa [#allocation7], 1

</llo_original>
